<compile_context>
chip_gen: v6e
topology: v6e:2x2x1
jax: 0.10.0
libtpu: 0.0.40
codegen_flags: <defaults>
</compile_context>

<pallas_src>
import functools
import math

import numpy as np
import jax
import jax.numpy as jnp
from jax.experimental import pallas as pl
from jax.experimental.pallas import tpu as pltpu

LANE = 128
LOSS_TILE = 512


def _round_up(x, m):
    return (x + m - 1) // m * m


# --------------------------------------------------------------------------
# Pallas kernels
# --------------------------------------------------------------------------

def _matmul_bias_kernel(x_ref, w_ref, b_ref, o_ref, *, relu):
    # x: [TM, K] bf16, w: [K, Np] bf16 (resident), b: [1, Np] f32 (resident)
    acc = jnp.dot(x_ref[...], w_ref[...], preferred_element_type=jnp.float32)
    acc = acc + b_ref[...]
    if relu:
        acc = jnp.maximum(acc, 0.0)
    o_ref[...] = acc.astype(o_ref.dtype)


def _log_sigmoid(x):
    # numerically stable log(sigmoid(x)) built from VPU/EUP-friendly primitives
    return jnp.minimum(x, 0.0) - jnp.log1p(jnp.exp(-jnp.abs(x)))


def _focal_prob_kernel(cls_ref, flt_ref, gt_ref, o_ref, *, alpha, gamma):
    # Focal loss on probabilities p = sigmoid(cls)*sigmoid(filter), matching
    # torch BCE-on-probs semantics (log terms clamped at -100).  Lane-dense:
    # locations on lanes, classes on sublanes.  Accumulates into resident (1,1).
    @pl.when(pl.program_id(0) == 0)
    def _init():
        o_ref[...] = jnp.zeros_like(o_ref)

    x = cls_ref[...]                       # [K, T] class logits
    f = flt_ref[...]                       # [1, T] filter logits
    gt = gt_ref[...]                       # [1, T] class id (float); K = background, -1 = pad
    cls_idx = jax.lax.broadcasted_iota(jnp.float32, x.shape, 0)
    t = (cls_idx == gt).astype(jnp.float32)            # one-hot target (zeros for bg / pad)
    valid = (gt >= 0.0).astype(jnp.float32)

    p = jax.nn.sigmoid(x) * jax.nn.sigmoid(f)
    logp = jnp.maximum(_log_sigmoid(x) + _log_sigmoid(f), -100.0)
    log1mp = jnp.maximum(jnp.log1p(-p), -100.0)
    ce = -(t * logp + (1.0 - t) * log1mp)
    p_t = p * t + (1.0 - p) * (1.0 - t)
    w = 1.0 - p_t
    mod = w * w if float(gamma) == 2.0 else w ** gamma  # gamma=2 -> one VALU mul, no pow
    loss = ce * mod
    if alpha >= 0:
        loss = (alpha * t + (1.0 - alpha) * (1.0 - t)) * loss
    o_ref[...] += jnp.sum(loss * valid, axis=(0, 1), keepdims=True)


def _sigmoid_focal_kernel(cls_ref, gt_ref, o_ref, *, alpha, gamma):
    # sigmoid_focal_loss on logits (aux loss), same lane-dense/accumulate scheme.
    @pl.when(pl.program_id(0) == 0)
    def _init():
        o_ref[...] = jnp.zeros_like(o_ref)

    x = cls_ref[...]                       # [K, T]
    gt = gt_ref[...]                       # [1, T]
    cls_idx = jax.lax.broadcasted_iota(jnp.float32, x.shape, 0)
    t = (cls_idx == gt).astype(jnp.float32)
    valid = (gt >= 0.0).astype(jnp.float32)

    p = jax.nn.sigmoid(x)
    ce = jnp.maximum(x, 0.0) - x * t + jnp.log1p(jnp.exp(-jnp.abs(x)))
    p_t = p * t + (1.0 - p) * (1.0 - t)
    w = 1.0 - p_t
    mod = w * w if float(gamma) == 2.0 else w ** gamma
    loss = ce * mod
    if alpha >= 0:
        loss = (alpha * t + (1.0 - alpha) * (1.0 - t)) * loss
    o_ref[...] += jnp.sum(loss * valid, axis=(0, 1), keepdims=True)


def _giou_loss_kernel(p_ref, t_ref, gt_ref, o_ref, *, num_classes):
    # iou_loss(box_mode='ltrb', loss_type='giou'); ltrb components on sublanes,
    # locations on lanes; foreground mask built in-kernel from the gt-class row.
    @pl.when(pl.program_id(0) == 0)
    def _init():
        o_ref[...] = jnp.zeros_like(o_ref)

    eps = jnp.float32(np.finfo(np.float32).eps)
    pr = p_ref[...]                        # [4, T] predicted ltrb deltas
    tg = t_ref[...]                        # [4, T] target ltrb deltas
    gt = gt_ref[...]                       # [1, T]
    fg = ((gt >= 0.0) & (gt != float(num_classes))).astype(jnp.float32)

    px1, py1, px2, py2 = -pr[0:1], -pr[1:2], pr[2:3], pr[3:4]
    tx1, ty1, tx2, ty2 = -tg[0:1], -tg[1:2], tg[2:3], tg[3:4]
    p_area = jnp.maximum(px2 - px1, 0.0) * jnp.maximum(py2 - py1, 0.0)
    t_area = jnp.maximum(tx2 - tx1, 0.0) * jnp.maximum(ty2 - ty1, 0.0)
    wi = jnp.maximum(jnp.minimum(px2, tx2) - jnp.maximum(px1, tx1), 0.0)
    hi = jnp.maximum(jnp.minimum(py2, ty2) - jnp.maximum(py1, ty1), 0.0)
    inter = wi * hi
    union = p_area + t_area - inter
    ious = inter / jnp.maximum(union, eps)
    gw = jnp.maximum(px2, tx2) - jnp.minimum(px1, tx1)
    gh = jnp.maximum(py2, ty2) - jnp.minimum(py1, ty1)
    ac = gw * gh
    gious = ious - (ac - union) / jnp.maximum(ac, eps)
    loss = 1.0 - gious
    o_ref[...] += jnp.sum(loss * fg, axis=(0, 1), keepdims=True)


# --------------------------------------------------------------------------
# Pallas wrappers
# --------------------------------------------------------------------------

def matmul_bias(x, w, b, *, relu, out_dtype=jnp.float32, tile_m=512):
    """Gridded MXU matmul: out = relu?(x @ w + b).

    - M axis gridded (double-buffered) and marked "parallel" (v7x megacore).
    - Inputs cast to bf16, f32 accumulation on the MXU.
    - Cout padded to a multiple of 128 for lane-dense (unmasked) stores; the
      padding is sliced off in the wrapper.
    - Weights/bias are resident across the grid (index_map -> (0, 0)).
    """
    M, Kd = x.shape
    Cout = w.shape[1]
    Np = _round_up(Cout, LANE)
    TM = tile_m if M >= tile_m else _round_up(M, 16)
    Mp = _round_up(M, TM)

    xp = jnp.pad(x.astype(jnp.bfloat16), ((0, Mp - M), (0, 0)))
    wp = jnp.pad(w.astype(jnp.bfloat16), ((0, 0), (0, Np - Cout)))
    bp = jnp.pad(b.astype(jnp.float32), (0, Np - Cout)).reshape(1, Np)

    out = pl.pallas_call(
        functools.partial(_matmul_bias_kernel, relu=relu),
        out_shape=jax.ShapeDtypeStruct((Mp, Np), out_dtype),
        grid=(Mp // TM,),
        in_specs=[
            pl.BlockSpec((TM, Kd), lambda i: (i, 0)),
            pl.BlockSpec((Kd, Np), lambda i: (0, 0)),   # resident weights
            pl.BlockSpec((1, Np), lambda i: (0, 0)),    # resident bias
        ],
        out_specs=pl.BlockSpec((TM, Np), lambda i: (i, 0)),
        compiler_params=pltpu.CompilerParams(
            dimension_semantics=("parallel",)),
    )(xp, wp, bp)
    return out[:M, :Cout]


def _loss_reduce(kernel, arrs, tile):
    """Masked sum-reduction over the lane (location) axis, gridded over tiles
    with a resident (1,1) accumulator output."""
    Rp = arrs[0].shape[1]
    in_specs = [pl.BlockSpec((a.shape[0], tile), lambda i: (0, i)) for a in arrs]
    out = pl.pallas_call(
        kernel,
        out_shape=jax.ShapeDtypeStruct((1, 1), jnp.float32),
        grid=(Rp // tile,),
        in_specs=in_specs,
        out_specs=pl.BlockSpec((1, 1), lambda i: (0, 0)),
        compiler_params=pltpu.CompilerParams(
            dimension_semantics=("arbitrary",)),
    )(*arrs)
    return out[0, 0]


def _im2col_3x3(x, stride):
    """3x3/pad=1 im2col: [N,H,W,C] -> [N*Ho*Wo, 9*C] (tap-major, channel-minor,
    matching w.reshape(9*C, Cout) of a HWIO kernel).
    TODO(synk): replace with an in-kernel 9-tap gather (manual DMA of a padded
    row band) to remove the 9x HBM inflation at large resolutions."""
    N, H, W, C = x.shape
    xp = jnp.pad(x, ((0, 0), (1, 1), (1, 1), (0, 0)))
    Ho = (H + 2 - 3) // stride + 1
    Wo = (W + 2 - 3) // stride + 1
    cols = []
    for di in range(3):
        for dj in range(3):
            cols.append(xp[:, di:di + stride * (Ho - 1) + 1:stride,
                           dj:dj + stride * (Wo - 1) + 1:stride, :])
    return jnp.concatenate(cols, axis=-1).reshape(N * Ho * Wo, 9 * C), Ho, Wo


def conv3x3(x, w, b, stride, relu, out_dtype=jnp.bfloat16):
    """3x3 conv, padding=1, via im2col (glue) + gridded Pallas matmul kernel."""
    N = x.shape[0]
    Cout = w.shape[-1]
    patches, Ho, Wo = _im2col_3x3(x, stride)
    out = matmul_bias(patches, w.reshape(-1, Cout), b, relu=relu, out_dtype=out_dtype)
    return out.reshape(N, Ho, Wo, Cout)


# --------------------------------------------------------------------------
# FCOS pieces (glue)
# --------------------------------------------------------------------------

CFG = dict(
    num_classes=8,
    fpn_strides=[8, 16],
    poto_alpha=0.8,
    center_sampling_radius=1.5,
    poto_aux_topk=9,
    focal_loss_alpha=0.25,
    focal_loss_gamma=2.0,
    iou_loss_type="giou",
    reg_weight=2.0,
    bbox_reg_weights=(1.0, 1.0, 1.0, 1.0),
)
PIXEL_MEAN = jnp.array([103.53, 116.28, 123.675], jnp.float32)
PIXEL_STD = jnp.array([57.375, 57.12, 58.395], jnp.float32)


def get_deltas(shifts, boxes, weights=CFG["bbox_reg_weights"]):
    d = jnp.concatenate([shifts - boxes[..., :2], boxes[..., 2:] - shifts], axis=-1)
    return d * jnp.asarray(weights, jnp.float32)


def apply_deltas(deltas, shifts, weights=CFG["bbox_reg_weights"]):
    d = deltas / jnp.asarray(weights, jnp.float32)
    return jnp.concatenate([shifts - d[..., :2], shifts + d[..., 2:]], axis=-1)


def pairwise_iou(b1, b2):
    area1 = (b1[:, 2] - b1[:, 0]) * (b1[:, 3] - b1[:, 1])
    area2 = (b2[:, 2] - b2[:, 0]) * (b2[:, 3] - b2[:, 1])
    lt = jnp.maximum(b1[:, None, :2], b2[None, :, :2])
    rb = jnp.minimum(b1[:, None, 2:], b2[None, :, 2:])
    wh = jnp.clip(rb - lt, 0.0)
    inter = wh[..., 0] * wh[..., 1]
    union = area1[:, None] + area2[None, :] - inter
    return jnp.where(inter > 0, inter / union, 0.0)


def lsa_maximize(cost):
    """Hungarian assignment (maximize), as in the reference (host scipy)."""
    try:
        from scipy.optimize import linear_sum_assignment
        return linear_sum_assignment(cost, maximize=True)
    except Exception:
        # TODO(synk): greedy fallback approximates scipy.optimize.linear_sum_assignment
        c = cost.copy().astype(np.float64)
        G, R = c.shape
        rows, cols = [], []
        for _ in range(min(G, R)):
            i, j = np.unravel_index(np.argmax(c), c.shape)
            rows.append(i)
            cols.append(j)
            c[i, :] = -np.inf
            c[:, j] = -np.inf
        order = np.argsort(rows)
        return np.asarray(rows)[order], np.asarray(cols)[order]


def shift_generator(feats, strides):
    shifts = []
    for f, s in zip(feats, strides):
        H, W = f.shape[1], f.shape[2]
        xs = (jnp.arange(W, dtype=jnp.float32) + 0.5) * s
        ys = (jnp.arange(H, dtype=jnp.float32) + 0.5) * s
        yy, xx = jnp.meshgrid(ys, xs, indexing="ij")
        shifts.append(jnp.stack([xx.reshape(-1), yy.reshape(-1)], axis=-1))
    return shifts


def backbone_forward(x_centered, bp, pixel_std):
    # Normalization fold: 1/std scaled into conv1 weights (mean was subtracted
    # in the wrapper), so the standalone normalize pass is eliminated.
    w1 = bp["w1"] / pixel_std.reshape(1, 1, 3, 1)
    c1 = conv3x3(x_centered, w1, bp["b1"], 2, relu=True)   # stride 2, bf16 features
    c2 = conv3x3(c1, bp["w2"], bp["b2"], 2, relu=True)     # stride 4
    p3 = conv3x3(c2, bp["w3"], bp["b3"], 2, relu=True)     # stride 8
    p4 = conv3x3(p3, bp["w4"], bp["b4"], 2, relu=True)     # stride 16
    return [p3, p4]


def head_forward(feats, strides, hp, K):
    """Fused head: 2 Pallas launches for all levels / branches."""
    C = hp["cls_subnet_w"].shape[2]
    N = feats[0].shape[0]

    # ---- stage 1: cls_subnet & bbox_subnet (shared input), both levels, one launch
    dims, p_list = [], []
    for f in feats:
        p, Ho, Wo = _im2col_3x3(f, 1)
        p_list.append(p)
        dims.append((Ho, Wo))
    lens = [p.shape[0] for p in p_list]
    patches1 = jnp.concatenate(p_list, axis=0)
    w_s1 = jnp.concatenate([hp["cls_subnet_w"], hp["bbox_subnet_w"]], axis=-1).reshape(9 * C, 2 * C)
    b_s1 = jnp.concatenate([hp["cls_subnet_b"], hp["bbox_subnet_b"]])
    s1 = matmul_bias(patches1, w_s1, b_s1, relu=True, out_dtype=jnp.bfloat16)  # [sumM, 2C]

    # per-level feature maps with channels [cls_t(0:C) | box_t(C:2C)]
    s1_levels, off = [], 0
    for (Ho, Wo), L in zip(dims, lens):
        s1_levels.append(s1[off:off + L].reshape(N, Ho, Wo, 2 * C))
        off += L

    # ---- stage 2: cls_score / bbox_pred / filter via one block-diagonal matmul
    p2_list = []
    for t in s1_levels:
        p2, _, _ = _im2col_3x3(t, 1)
        p2_list.append(p2)
    patches2 = jnp.concatenate(p2_list, axis=0)

    zeros_c5 = jnp.zeros((3, 3, C, 5), jnp.float32)
    zeros_ck = jnp.zeros((3, 3, C, K), jnp.float32)
    w_box = jnp.concatenate([hp["bbox_pred_w"], hp["filter_w"]], axis=-1)          # [3,3,C,5]
    w_s2 = jnp.concatenate(
        [jnp.concatenate([hp["cls_score_w"], zeros_c5], axis=-1),                  # cls_t rows
         jnp.concatenate([zeros_ck, w_box], axis=-1)],                             # box_t rows
        axis=2).reshape(9 * 2 * C, K + 5)
    b_s2 = jnp.concatenate([hp["cls_score_b"], hp["bbox_pred_b"], hp["filter_b"]])
    s2 = matmul_bias(patches2, w_s2, b_s2, relu=False, out_dtype=jnp.float32)      # [sumM, K+5]

    cls_out, reg_out, flt_out = [], [], []
    off = 0
    for (Ho, Wo), L, s in zip(dims, lens, strides):
        o = s2[off:off + L].reshape(N, Ho, Wo, K + 5)
        off += L
        cls_out.append(o[..., :K])
        reg_out.append(jnp.maximum(o[..., K:K + 4], 0.0) * s)   # relu(bbox_pred) * stride
        flt_out.append(o[..., K + 4:K + 5])
    return cls_out, reg_out, flt_out


def _cat_levels(xs, k):
    return jnp.concatenate([x.reshape(x.shape[0], -1, k) for x in xs], axis=1)


def get_ground_truth(shifts_per_level, gt_boxes_list, gt_classes_list,
                     box_cls, box_delta, box_filter, cfg):
    K, alpha = cfg["num_classes"], cfg["poto_alpha"]
    cls_cat = _cat_levels(box_cls, K)
    del_cat = _cat_levels(box_delta, 4)
    flt_cat = _cat_levels(box_filter, 1)
    prob_all = jax.nn.sigmoid(cls_cat) * jax.nn.sigmoid(flt_cat)
    shifts_all = jnp.concatenate(shifts_per_level, axis=0)
    R = shifts_all.shape[0]

    gt_cls_out, gt_del_out = [], []
    for img in range(cls_cat.shape[0]):
        gtb, gtc = gt_boxes_list[img], gt_classes_list[img]
        G = gtb.shape[0]
        prob = prob_all[img][:, gtc].T                       # [G, R]
        boxes = apply_deltas(del_cat[img], shifts_all)       # [R, 4]
        iou = pairwise_iou(gtb, boxes)                       # [G, R]
        quality = prob ** (1.0 - alpha) * iou ** alpha
        if cfg["center_sampling_radius"] > 0:
            centers = (gtb[:, :2] + gtb[:, 2:]) / 2.0
            in_boxes = []
            for stride, shifts_i in zip(cfg["fpn_strides"], shifts_per_level):
                radius = stride * cfg["center_sampling_radius"]
                cb = jnp.concatenate([jnp.maximum(centers - radius, gtb[:, :2]),
                                      jnp.minimum(centers + radius, gtb[:, 2:])], axis=-1)
                cd = get_deltas(shifts_i, cb[:, None, :])
                in_boxes.append(cd.min(axis=-1) > 0)
            is_in_boxes = jnp.concatenate(in_boxes, axis=1)
        else:
            is_in_boxes = get_deltas(shifts_all, gtb[:, None, :]).min(axis=-1) > 0
        quality = jnp.where(is_in_boxes, quality, -1.0)

        q_np = np.asarray(jax.device_get(quality))
        gt_idxs, shift_idxs = lsa_maximize(q_np)

        gt_cls_i = np.full((R,), K, dtype=np.int32)
        gt_del_i = np.zeros((R, 4), dtype=np.float32)
        if G > 0:
            gt_cls_i[shift_idxs] = np.asarray(jax.device_get(gtc))[gt_idxs]
            sel = get_deltas(shifts_all[jnp.asarray(shift_idxs)], gtb[jnp.asarray(gt_idxs)])
            gt_del_i[shift_idxs] = np.asarray(jax.device_get(sel))
        gt_cls_out.append(gt_cls_i)
        gt_del_out.append(gt_del_i)
    return jnp.asarray(np.stack(gt_cls_out)), jnp.asarray(np.stack(gt_del_out))


def _pad_lane(x_t, Rp, value=0.0):
    R = x_t.shape[1]
    return jnp.pad(x_t, ((0, 0), (0, Rp - R)), constant_values=value)


def losses(gt_classes, gt_deltas, box_cls, box_delta, box_filter, cfg):
    K = cfg["num_classes"]
    logits = _cat_levels(box_cls, K).reshape(-1, K)
    deltas = _cat_levels(box_delta, 4).reshape(-1, 4)
    filt = _cat_levels(box_filter, 1).reshape(-1, 1)
    gt_c = gt_classes.reshape(-1).astype(jnp.float32)
    gt_d = gt_deltas.reshape(-1, 4)

    NR = gt_c.shape[0]
    Rp = _round_up(max(NR, LOSS_TILE), LOSS_TILE)

    fg = (gt_c >= 0) & (gt_c != K)
    denom = jnp.maximum(1.0, jnp.sum(fg.astype(jnp.float32)))

    # Lane-dense transposed layouts: locations on the 128-lane axis; padding
    # rows are flagged with gt = -1 so they contribute zero inside the kernels.
    gt_row = _pad_lane(gt_c.reshape(1, NR), Rp, value=-1.0)
    cls_t = _pad_lane(logits.astype(jnp.float32).T, Rp)
    flt_t = _pad_lane(filt.astype(jnp.float32).T, Rp)
    pd_t = _pad_lane(deltas.astype(jnp.float32).T, Rp)
    gd_t = _pad_lane(gt_d.astype(jnp.float32).T, Rp)

    loss_cls = _loss_reduce(
        functools.partial(_focal_prob_kernel, alpha=cfg["focal_loss_alpha"],
                          gamma=cfg["focal_loss_gamma"]),
        [cls_t, flt_t, gt_row], LOSS_TILE) / denom
    loss_box = _loss_reduce(
        functools.partial(_giou_loss_kernel, num_classes=K),
        [pd_t, gd_t, gt_row], LOSS_TILE) / denom * cfg["reg_weight"]
    return {"loss_cls": loss_cls, "loss_box_reg": loss_box}


def get_aux_ground_truth(shifts_per_level, gt_boxes_list, gt_classes_list,
                         box_cls, box_delta, cfg):
    K, alpha, topk = cfg["num_classes"], cfg["poto_alpha"], cfg["poto_aux_topk"]
    cls_cat = jax.nn.sigmoid(_cat_levels(box_cls, K))
    del_cat = _cat_levels(box_delta, 4)
    shifts_all = jnp.concatenate(shifts_per_level, axis=0)
    level_lens = [s.shape[0] for s in shifts_per_level]

    out = []
    for img in range(cls_cat.shape[0]):
        gtb, gtc = gt_boxes_list[img], gt_classes_list[img]
        G = gtb.shape[0]
        prob = cls_cat[img][:, gtc].T
        boxes = apply_deltas(del_cat[img], shifts_all)
        iou = pairwise_iou(gtb, boxes)
        quality = prob ** (1.0 - alpha) * iou ** alpha

        cand, st = [], 0
        for L in level_lens:
            _, idx = jax.lax.top_k(quality[:, st:st + L], topk)
            cand.append(st + idx)
            st += L
        cand = jnp.concatenate(cand, axis=1)

        is_in_boxes = get_deltas(shifts_all, gtb[:, None, :]).min(axis=-1) > 0
        cq = jnp.take_along_axis(quality, cand, axis=1)
        thr = cq.mean(axis=1, keepdims=True) + jnp.std(cq, axis=1, keepdims=True, ddof=1)
        is_fg = jnp.zeros_like(is_in_boxes).at[jnp.arange(G)[:, None], cand].set(True)
        is_fg = is_fg & (quality >= thr)

        quality = jnp.where(is_in_boxes, quality, -1.0)
        quality = jnp.where(is_fg, quality, -1.0)
        pos_max = quality.max(axis=0)
        gt_match = jnp.argmax(quality, axis=0)
        gt_cls_i = jnp.where(pos_max == -1.0, K, gtc[gt_match]).astype(jnp.int32)
        out.append(gt_cls_i)
    return jnp.stack(out)


def aux_losses(gt_classes, box_cls, cfg):
    K = cfg["num_classes"]
    logits = _cat_levels(box_cls, K).reshape(-1, K)
    gt_c = gt_classes.reshape(-1).astype(jnp.float32)
    NR = gt_c.shape[0]
    Rp = _round_up(max(NR, LOSS_TILE), LOSS_TILE)

    fg = (gt_c >= 0) & (gt_c != K)
    denom = jnp.maximum(1.0, jnp.sum(fg.astype(jnp.float32)))

    gt_row = _pad_lane(gt_c.reshape(1, NR), Rp, value=-1.0)
    cls_t = _pad_lane(logits.astype(jnp.float32).T, Rp)

    loss = _loss_reduce(
        functools.partial(_sigmoid_focal_kernel, alpha=cfg["focal_loss_alpha"],
                          gamma=cfg["focal_loss_gamma"]),
        [cls_t, gt_row], LOSS_TILE) / denom
    return {"loss_cls_aux": loss}


def fcos_forward_train(images_nchw, gt_boxes_list, gt_classes_list, params, cfg):
    # Normalization fold: subtract mean here (fuses into the conv1 im2col gather,
    # no standalone Pallas pass / HBM round trip), 1/std is folded into w1.
    # Zero padding of (x - mean) equals zero padding of the normalized image,
    # so this is exactly equivalent to normalize-then-conv.
    x = jnp.transpose(images_nchw, (0, 2, 3, 1)).astype(jnp.float32) - PIXEL_MEAN
    # TODO(synk): ImageList.from_tensors size-divisibility padding skipped (inputs already divisible).
    feats = backbone_forward(x, params["backbone"], PIXEL_STD)
    box_cls, box_delta, box_filter = head_forward(
        feats, cfg["fpn_strides"], params["head"], cfg["num_classes"])
    shifts = shift_generator(feats, cfg["fpn_strides"])

    gt_classes, gt_deltas = get_ground_truth(
        shifts, gt_boxes_list, gt_classes_list, box_cls, box_delta, box_filter, cfg)
    out = losses(gt_classes, gt_deltas, box_cls, box_delta, box_filter, cfg)
    aux_gt = get_aux_ground_truth(shifts, gt_boxes_list, gt_classes_list, box_cls, box_delta, cfg)
    out.update(aux_losses(aux_gt, box_cls, cfg))
    return out


# --------------------------------------------------------------------------
# Deterministic parameter init
# --------------------------------------------------------------------------

def init_params(key, C=16, K=8):
    keys = jax.random.split(key, 16)

    def w(k, shape):
        return 0.05 * jax.random.normal(k, shape, jnp.float32)

    backbone = {
        "w1": w(keys[0], (3, 3, 3, C)), "b1": jnp.zeros((C,), jnp.float32),
        "w2": w(keys[1], (3, 3, C, C)), "b2": jnp.zeros((C,), jnp.float32),
        "w3": w(keys[2], (3, 3, C, C)), "b3": jnp.zeros((C,), jnp.float32),
        "w4": w(keys[3], (3, 3, C, C)), "b4": jnp.zeros((C,), jnp.float32),
    }
    prior = -math.log((1.0 - 0.01) / 0.01)
    head = {
        "cls_subnet_w": w(keys[4], (3, 3, C, C)), "cls_subnet_b": jnp.zeros((C,), jnp.float32),
        "bbox_subnet_w": w(keys[5], (3, 3, C, C)), "bbox_subnet_b": jnp.zeros((C,), jnp.float32),
        "cls_score_w": w(keys[6], (3, 3, C, K)), "cls_score_b": jnp.full((K,), prior, jnp.float32),
        "bbox_pred_w": w(keys[7], (3, 3, C, 4)), "bbox_pred_b": jnp.ones((4,), jnp.float32),
        "filter_w": w(keys[8], (3, 3, C, 1)), "filter_b": jnp.zeros((1,), jnp.float32),
    }
    return {"backbone": backbone, "head": head}


# --------------------------------------------------------------------------
# Main
# --------------------------------------------------------------------------

if __name__ == "__main__":
    key = jax.random.PRNGKey(0)
    k_img, k_par = jax.random.split(key)

    images = jax.random.uniform(k_img, (2, 3, 64, 64), jnp.float32) * 255.0
    gt_boxes_list = [
        jnp.array([[4.0, 4.0, 28.0, 30.0],
                   [30.0, 10.0, 60.0, 50.0],
                   [8.0, 40.0, 24.0, 62.0]], jnp.float32),
        jnp.array([[10.0, 12.0, 50.0, 52.0],
                   [36.0, 4.0, 62.0, 26.0]], jnp.float32),
    ]
    gt_classes_list = [
        jnp.array([1, 3, 5], jnp.int32),
        jnp.array([0, 7], jnp.int32),
    ]

    params = init_params(k_par, C=16, K=CFG["num_classes"])
    out = fcos_forward_train(images, gt_boxes_list, gt_classes_list, params, CFG)
    for v in out.values():
        jax.block_until_ready(v)
    print("KERNEL_OK")
</pallas_src>

<mosaic_0001>
module attributes {stable_mosaic.version = 11 : i64} {
  func.func @_matmul_bias_kernel(%arg0: i32, %arg1: memref<512x27xbf16, #tpu.memory_space<vmem>>, %arg2: memref<27x128xbf16, #tpu.memory_space<vmem>>, %arg3: memref<1x128xf32, #tpu.memory_space<vmem>>, %arg4: memref<512x128xbf16, #tpu.memory_space<vmem>>) attributes {dimension_semantics = [#tpu.dimension_semantics<parallel>], iteration_bounds = array<i64: 4>, scalar_prefetch = 0 : i64, scratch_operands = 0 : i64, tpu.core_type = #tpu.core_type<tc>, window_params = [{transform_indices = @transform_0, window_bounds = array<i64: 512, 27>}, {pipeline_mode = #tpu.pipeline_mode<synchronous>, transform_indices = @transform_1, window_bounds = array<i64: 27, 128>}, {pipeline_mode = #tpu.pipeline_mode<synchronous>, transform_indices = @transform_2, window_bounds = array<i64: 1, 128>}, {transform_indices = @transform_3, window_bounds = array<i64: 512, 128>}]} {
    %c0 = arith.constant 0 : index
    %c0_0 = arith.constant 0 : index
    %0 = vector.load %arg1[%c0, %c0_0] : memref<512x27xbf16, #tpu.memory_space<vmem>>, vector<512x27xbf16>
    %c0_1 = arith.constant 0 : index
    %c0_2 = arith.constant 0 : index
    %1 = vector.load %arg2[%c0_1, %c0_2] : memref<27x128xbf16, #tpu.memory_space<vmem>>, vector<27x128xbf16>
    %cst = arith.constant dense<0.000000e+00> : vector<512x128xf32>
    %2 = tpu.matmul %0, %1, %cst {dimension_numbers = #tpu.dot_dimension_numbers<[1], [0], [0], [1], [0, 0, 1, 1], [], []>} : vector<512x27xbf16>, vector<27x128xbf16>, vector<512x128xf32> -> vector<512x128xf32>
    %c0_3 = arith.constant 0 : index
    %c0_4 = arith.constant 0 : index
    %3 = vector.load %arg3[%c0_3, %c0_4] : memref<1x128xf32, #tpu.memory_space<vmem>>, vector<1x128xf32>
    %4 = vector.broadcast %3 : vector<1x128xf32> to vector<512x128xf32>
    %5 = arith.addf %2, %4 : vector<512x128xf32>
    %cst_5 = arith.constant 0.000000e+00 : f32
    %6 = vector.broadcast %cst_5 : f32 to vector<512x128xf32>
    %7 = arith.maximumf %5, %6 : vector<512x128xf32>
    %8 = arith.truncf %7 : vector<512x128xf32> to vector<512x128xbf16>
    %c0_6 = arith.constant 0 : index
    %c0_7 = arith.constant 0 : index
    %9 = vector.load %arg4[%c0_6, %c0_7] : memref<512x128xbf16, #tpu.memory_space<vmem>>, vector<512x128xbf16>
    tpu.vector_store %arg4[%c0_6, %c0_7], %8 {strides = array<i32>} : memref<512x128xbf16, #tpu.memory_space<vmem>>, vector<512x128xbf16>,
    return
  }
  func.func @transform_0(%arg0: i32) -> (i32, i32) {
    %c0_i32 = arith.constant 0 : i32
    %c0_i32_0 = arith.constant 0 : i32
    return %arg0, %c0_i32 : i32, i32
  }
  func.func @transform_1(%arg0: i32) -> (i32, i32) {
    %c0_i32 = arith.constant 0 : i32
    %c0_i32_0 = arith.constant 0 : i32
    %c0_i32_1 = arith.constant 0 : i32
    return %c0_i32, %c0_i32_0 : i32, i32
  }
  func.func @transform_2(%arg0: i32) -> (i32, i32) {
    %c0_i32 = arith.constant 0 : i32
    %c0_i32_0 = arith.constant 0 : i32
    %c0_i32_1 = arith.constant 0 : i32
    return %c0_i32, %c0_i32_0 : i32, i32
  }
  func.func @transform_3(%arg0: i32) -> (i32, i32) {
    %c0_i32 = arith.constant 0 : i32
    %c0_i32_0 = arith.constant 0 : i32
    return %arg0, %c0_i32 : i32, i32
  }
}

</mosaic_0001>

<llo_original>
// kernel: tpu_custom_call.1
$region0: #{tpu_custom_call.1}
  #allocation0 [shape = 'u32[]', space=smem, size = 0x4, offset = 0x4, fixed_abs, tag = 'smem constant byte address 0x4 - core index']
  #allocation1 [shape = 'u32[144,128]{1,0:T(1,128)}', space=vmem, size = 0x12000, scoped, tag = 'internal scratch']
  %s0 = inlined_call_operand.vmem [shape: bf16[2048,27], index: 0, kind: input, shape index: {}]
  %s1 = inlined_call_operand.vmem [shape: bf16[27,128], index: 1, kind: input, shape index: {}]
  %s2 = inlined_call_operand.vmem [shape: f32[1,128], index: 2, kind: input, shape index: {}]
  %s3 = inlined_call_operand.hbm [shape: bf16[2048,128], index: 3, kind: output, shape index: {}]
  %s4 = sld [smem:[#allocation0]]
  $region45: #{tpu_custom_call.1} parent=0
    _
  %s6 = ssub.s32 1, %s4
  %s7 = scalar_select 0, %s6, %s4
  $region1: #{tpu_custom_call.1} parent=0
    #allocation2 [shape = 'u8[262144]{0}', space=vmem, size = 0x40000, scoped, tag = 'output window, operand 0']
    #allocation3 [shape = 's32[2]{0}', space=sflag, size = 0x8, scoped, tag = 'scoped memory for tpu_custom_call.1']
    %8 = vsyncpa [#allocation3], 0
    %s9 = scalar_lea.sflag [#allocation3], 1
    %10 = vsyncpa %s9, 0
    loop: start=0, step=1, limit=6
    $region2: #{tpu_custom_call.1} parent=1 // loop_pre_header
      _
    $region3: #{tpu_custom_call.1} parent=1 // loop_header
      %s12 = sphi 0, %s16
      %p13 = scmp.ge.s32.totalorder %s12, 6
      %s22 = sphi 0, %s24
      %s25 = sphi 0, %s22
      %s26 = sphi 0, %s25
      %s42 = sphi 0, %s26
      %s46 = sphi 0, %s46
      %s48 = sphi 0, %s46
      %s49 = sphi 0, %s48
      %s63 = sphi 0, %s49
      %s67 = sphi 0, %s67
      %s69 = sphi 0, %s67
      %s70 = sphi 0, %s69
      %s84 = sphi 0, %s70
      %s90 = sphi 0, %s92
      %s93 = sphi 0, %s90
      %s94 = sphi 0, %s93
      %s110 = sphi 0, %s94
    $region4: #{tpu_custom_call.1} parent=1 // loop_header_branch
      %15 = sbr.rel (%p13) target = $region8
    $region5: #{tpu_custom_call.1} parent=1 // loop_body
      %s17 = ssub.s32 %s12, 1
      %s18 = ssub.s32 %s12, 2
      %s19 = sadd.s32 %s12, 1
      %s20 = ssub.s32 %s12, %s19
      %p21 = scmp.eq.s32.totalorder %s20, 0
      %s23 = sadd.s32 %s22, 1
      %s24 = scalar_select %p21, %s22, %s23
      %p27 = pneg %p21
      %p28 = scmp.eq.s32.totalorder %s12, 3
      %p29 = por %p27, %p28
      %p30 = scmp.ne.s32.totalorder %s22, %s25
      %p31 = scmp.eq.s32.totalorder %s12, 0
      %p32 = por %p30, %p31
      %p33 = scmp.ne.s32.totalorder %s22, %s25
      %p34 = scmp.eq.s32.totalorder %s17, 3
      %p35 = por %p33, %p34
      %p36 = scmp.ne.s32.totalorder %s25, %s26
      %p37 = scmp.eq.s32.totalorder %s17, 0
      %p38 = por %p36, %p37
      %p39 = scmp.ne.s32.totalorder %s25, %s26
      %p40 = scmp.eq.s32.totalorder %s18, 3
      %p41 = por %p39, %p40
      %p43 = scmp.ne.s32.totalorder %s26, %s42
      %p44 = scmp.eq.s32.totalorder %s18, 0
      %p45 = por %p43, %p44
      %s47 = sadd.s32 %s46, 1
      %p50 = scmp.eq.s32.totalorder %s12, 3
      %p51 = scmp.ne.s32.totalorder %s46, %s48
      %p52 = scmp.eq.s32.totalorder %s12, 0
      %p53 = por %p51, %p52
      %p54 = scmp.ne.s32.totalorder %s46, %s48
      %p55 = scmp.eq.s32.totalorder %s17, 3
      %p56 = por %p54, %p55
      %p57 = scmp.ne.s32.totalorder %s48, %s49
      %p58 = scmp.eq.s32.totalorder %s17, 0
      %p59 = por %p57, %p58
      %p60 = scmp.ne.s32.totalorder %s48, %s49
      %p61 = scmp.eq.s32.totalorder %s18, 3
      %p62 = por %p60, %p61
      %p64 = scmp.ne.s32.totalorder %s49, %s63
      %p65 = scmp.eq.s32.totalorder %s18, 0
      %p66 = por %p64, %p65
      %s68 = sadd.s32 %s67, 1
      %p71 = scmp.eq.s32.totalorder %s12, 3
      %p72 = scmp.ne.s32.totalorder %s67, %s69
      %p73 = scmp.eq.s32.totalorder %s12, 0
      %p74 = por %p72, %p73
      %p75 = scmp.ne.s32.totalorder %s67, %s69
      %p76 = scmp.eq.s32.totalorder %s17, 3
      %p77 = por %p75, %p76
      %p78 = scmp.ne.s32.totalorder %s69, %s70
      %p79 = scmp.eq.s32.totalorder %s17, 0
      %p80 = por %p78, %p79
      %p81 = scmp.ne.s32.totalorder %s69, %s70
      %p82 = scmp.eq.s32.totalorder %s18, 3
      %p83 = por %p81, %p82
      %p85 = scmp.ne.s32.totalorder %s70, %s84
      %p86 = scmp.eq.s32.totalorder %s18, 0
      %p87 = por %p85, %p86
      %s88 = ssub.s32 %s12, %s19
      %p89 = scmp.eq.s32.totalorder %s88, 0
      %s91 = sadd.s32 %s90, 1
      %s92 = scalar_select %p89, %s90, %s91
      %p95 = pneg %p89
      %p96 = scmp.eq.s32.totalorder %s12, 3
      %p97 = por %p95, %p96
      %p98 = scmp.ne.s32.totalorder %s90, %s93
      %p99 = scmp.eq.s32.totalorder %s12, 0
      %p100 = por %p98, %p99
      %p101 = scmp.ne.s32.totalorder %s90, %s93
      %p102 = scmp.eq.s32.totalorder %s17, 3
      %p103 = por %p101, %p102
      %p104 = scmp.ne.s32.totalorder %s93, %s94
      %p105 = scmp.eq.s32.totalorder %s17, 0
      %p106 = por %p104, %p105
      %p107 = scmp.ne.s32.totalorder %s93, %s94
      %p108 = scmp.eq.s32.totalorder %s18, 3
      %p109 = por %p107, %p108
      %p111 = scmp.ne.s32.totalorder %s94, %s110
      %p112 = scmp.eq.s32.totalorder %s18, 0
      %p113 = por %p111, %p112
      %p114 = scmp.le.s32.totalorder 1, %s12
      %p115 = scmp.lt.s32.totalorder %s12, 5
      %p116 = pnand %p114, %p115
      %p117 = pneg %p116
      // Predicated region
      $region9: #{tpu_custom_call.1} parent=5 // pred_check
        _
      $region10: #{tpu_custom_call.1} parent=5 // pred_check_branch
        %119 = sbr.rel (%p116) target = $region12
      $region11: #{tpu_custom_call.1} parent=5 // pred_region
        %s120 = ssub.s32 %s12, 1
        // Predicated region
        $region13: #{tpu_custom_call.1} parent=11 // pred_check
          %p121 = pneg %p59
        $region14: #{tpu_custom_call.1} parent=11 // pred_check_branch
          %123 = sbr.rel (%p121) target = $region16
        $region15: #{tpu_custom_call.1} parent=11 // pred_region
          _
        $region16: #{tpu_custom_call.1} parent=11 // pred_fallthru
          _
        // Predicated region
        $region17: #{tpu_custom_call.1} parent=11 // pred_check
          %p124 = pneg %p80
        $region18: #{tpu_custom_call.1} parent=11 // pred_check_branch
          %126 = sbr.rel (%p124) target = $region20
        $region19: #{tpu_custom_call.1} parent=11 // pred_region
          _
        $region20: #{tpu_custom_call.1} parent=11 // pred_fallthru
          _
      $region12: #{tpu_custom_call.1} parent=5 // pred_fallthru
        _
      %p127 = scmp.lt.s32.totalorder %s12, 4
      // Predicated region
      $region21: #{tpu_custom_call.1} parent=5 // pred_check
        %p128 = pneg %p127
      $region22: #{tpu_custom_call.1} parent=5 // pred_check_branch
        %130 = sbr.rel (%p128) target = $region24
      $region23: #{tpu_custom_call.1} parent=5 // pred_region
        // Predicated region
        $region25: #{tpu_custom_call.1} parent=23 // pred_check
          %p131 = pneg %p32
        $region26: #{tpu_custom_call.1} parent=23 // pred_check_branch
          %133 = sbr.rel (%p131) target = $region28
        $region27: #{tpu_custom_call.1} parent=23 // pred_region
          %s134 = smul.u32 64, %s12
          %p135 = scmp.lt.s32.totalorder %s134, 255
          %s136 = scalar_select %p135, %s134, 255
          %s137 = smul.addr %s136, 4
          %s138 = scalar_lea.vmem %s0, %s137
          %s139 = smul.u32 64, %s12
        $region28: #{tpu_custom_call.1} parent=23 // pred_fallthru
          _
      $region24: #{tpu_custom_call.1} parent=5 // pred_fallthru
        _
      %p140 = scmp.le.s32.totalorder 1, %s12
      %p141 = scmp.lt.s32.totalorder %s12, 5
      %p142 = pnand %p140, %p141
      %p143 = pneg %p142
      // Predicated region
      $region29: #{tpu_custom_call.1} parent=5 // pred_check
        _
      $region30: #{tpu_custom_call.1} parent=5 // pred_check_branch
        %145 = sbr.rel (%p142) target = $region32
      $region31: #{tpu_custom_call.1} parent=5 // pred_region
        %s146 = ssub.s32 %s12, 1
        %s147 = smul.u32 64, %s17
        %p148 = scmp.lt.s32.totalorder %s147, 255
        %s149 = scalar_select %p148, %s147, 255
        %s150 = smul.addr %s149, 4
        %s151 = scalar_lea.vmem %s0, %s150
        %p152 = pneg %p38
        %p153 = pneg %p35
        %p154 = pneg %p59
        %p155 = pneg %p56
        %p156 = pneg %p80
        %p157 = pneg %p77
        %p158 = pneg %p106
        %p159 = pneg %p103
        %s160 = sand.u32 %s93, 1
        %s161 = scalar_lea.sflag [#allocation3], %s160
        %s162 = sand.u32 %s93, 1
        %s163 = smul.addr %s162, 256
        %s164 = scalar_lea.vmem [#allocation2], %s163
        %s165 = smul.u32 64, %s17
        %p166 = scmp.lt.s32.totalorder %s165, 255
        %s167 = scalar_select %p166, %s165, 255
        %s168 = smul.addr %s167, 4
        %s169 = scalar_lea.vmem %s0, %s168
        %s170 = smul.u32 64, %s17
        %s171 = smul.u32 64, %s17
        %v173 = vld [vmem:[%s169] sm:$0xf]
        %v174 = vld [vmem:[%s169 + $0x4] sm:$0xf]
        %v175 = vld [vmem:[%s169 + $0x8] sm:$0xf]
        %v176 = vld [vmem:[%s169 + $0xc] sm:$0xf]
        %v177 = vld [vmem:[%s169 + $0x10] sm:$0xf]
        %v178 = vld [vmem:[%s169 + $0x14] sm:$0xf]
        %v179 = vld [vmem:[%s169 + $0x18] sm:$0xf]
        %v180 = vld [vmem:[%s169 + $0x1c] sm:$0xf]
        %v181 = vld [vmem:[%s169 + $0x20] sm:$0xf]
        %v182 = vld [vmem:[%s169 + $0x24] sm:$0xf]
        %v183 = vld [vmem:[%s169 + $0x28] sm:$0xf]
        %v184 = vld [vmem:[%s169 + $0x2c] sm:$0xf]
        %v185 = vld [vmem:[%s169 + $0x30] sm:$0xf]
        %v186 = vld [vmem:[%s169 + $0x34] sm:$0xf]
        %v187 = vld [vmem:[%s169 + $0x38] sm:$0xf]
        %v188 = vld [vmem:[%s169 + $0x3c] sm:$0xf]
        %v189 = vld [vmem:[%s169 + $0x40] sm:$0xf]
        %v190 = vld [vmem:[%s169 + $0x44] sm:$0xf]
        %v191 = vld [vmem:[%s169 + $0x48] sm:$0xf]
        %v192 = vld [vmem:[%s169 + $0x4c] sm:$0xf]
        %v193 = vld [vmem:[%s169 + $0x50] sm:$0xf]
        %v194 = vld [vmem:[%s169 + $0x54] sm:$0xf]
        %v195 = vld [vmem:[%s169 + $0x58] sm:$0xf]
        %v196 = vld [vmem:[%s169 + $0x5c] sm:$0xf]
        %v197 = vld [vmem:[%s169 + $0x60] sm:$0xf]
        %v198 = vld [vmem:[%s169 + $0x64] sm:$0xf]
        %v199 = vld [vmem:[%s169 + $0x68] sm:$0xf]
        %v200 = vld [vmem:[%s169 + $0x6c] sm:$0xf]
        %v201 = vld [vmem:[%s169 + $0x70] sm:$0xf]
        %v202 = vld [vmem:[%s169 + $0x74] sm:$0xf]
        %v203 = vld [vmem:[%s169 + $0x78] sm:$0xf]
        %v204 = vld [vmem:[%s169 + $0x7c] sm:$0xf]
        %v205 = vld [vmem:[%s169 + $0x80] sm:$0xf]
        %v206 = vld [vmem:[%s169 + $0x84] sm:$0xf]
        %v207 = vld [vmem:[%s169 + $0x88] sm:$0xf]
        %v208 = vld [vmem:[%s169 + $0x8c] sm:$0xf]
        %v209 = vld [vmem:[%s169 + $0x90] sm:$0xf]
        %v210 = vld [vmem:[%s169 + $0x94] sm:$0xf]
        %v211 = vld [vmem:[%s169 + $0x98] sm:$0xf]
        %v212 = vld [vmem:[%s169 + $0x9c] sm:$0xf]
        %v213 = vld [vmem:[%s169 + $0xa0] sm:$0xf]
        %v214 = vld [vmem:[%s169 + $0xa4] sm:$0xf]
        %v215 = vld [vmem:[%s169 + $0xa8] sm:$0xf]
        %v216 = vld [vmem:[%s169 + $0xac] sm:$0xf]
        %v217 = vld [vmem:[%s169 + $0xb0] sm:$0xf]
        %v218 = vld [vmem:[%s169 + $0xb4] sm:$0xf]
        %v219 = vld [vmem:[%s169 + $0xb8] sm:$0xf]
        %v220 = vld [vmem:[%s169 + $0xbc] sm:$0xf]
        %v221 = vld [vmem:[%s169 + $0xc0] sm:$0xf]
        %v222 = vld [vmem:[%s169 + $0xc4] sm:$0xf]
        %v223 = vld [vmem:[%s169 + $0xc8] sm:$0xf]
        %v224 = vld [vmem:[%s169 + $0xcc] sm:$0xf]
        %v225 = vld [vmem:[%s169 + $0xd0] sm:$0xf]
        %v226 = vld [vmem:[%s169 + $0xd4] sm:$0xf]
        %v227 = vld [vmem:[%s169 + $0xd8] sm:$0xf]
        %v228 = vld [vmem:[%s169 + $0xdc] sm:$0xf]
        %v229 = vld [vmem:[%s169 + $0xe0] sm:$0xf]
        %v230 = vld [vmem:[%s169 + $0xe4] sm:$0xf]
        %v231 = vld [vmem:[%s169 + $0xe8] sm:$0xf]
        %v232 = vld [vmem:[%s169 + $0xec] sm:$0xf]
        %v233 = vld [vmem:[%s169 + $0xf0] sm:$0xf]
        %v234 = vld [vmem:[%s169 + $0xf4] sm:$0xf]
        %v235 = vld [vmem:[%s169 + $0xf8] sm:$0xf]
        %v236 = vld [vmem:[%s169 + $0xfc] sm:$0xf]
        %v237 = vld [vmem:[%s1] sm:$0xf]
        %v238 = vld [vmem:[%s1 + $0x4] sm:$0xf]
        %v239 = vld [vmem:[%s1 + $0x8] sm:$0xf]
        %v240 = vld [vmem:[%s1 + $0xc] sm:$0x3]
        %v241 = vld [vmem:[%s2] sm:$0x1]
        %v243 = vlaneseq
        %v244 = vshrl.u32 %v243, 7
        %v245 = vsub.s32 0, %v244
        %v246 = vrot.slane %v241, %v245
        %v312 = vunpack.c.l.b16 %v173
        %v313 = vunpack.c.l.b16 %v174
        %v314 = vunpack.c.l.b16 %v175
        %v315 = vunpack.c.l.b16 %v176
        %v316 = vunpack.c.l.b16 %v177
        %v317 = vunpack.c.l.b16 %v178
        %v318 = vunpack.c.l.b16 %v179
        %v319 = vunpack.c.l.b16 %v180
        %v320 = vunpack.c.l.b16 %v181
        %v321 = vunpack.c.l.b16 %v182
        %v322 = vunpack.c.l.b16 %v183
        %v323 = vunpack.c.l.b16 %v184
        %v324 = vunpack.c.l.b16 %v185
        %v325 = vunpack.c.l.b16 %v186
        %v326 = vunpack.c.l.b16 %v187
        %v327 = vunpack.c.l.b16 %v188
        %v328 = vunpack.c.l.b16 %v189
        %v329 = vunpack.c.l.b16 %v190
        %v330 = vunpack.c.l.b16 %v191
        %v331 = vunpack.c.l.b16 %v192
        %v332 = vunpack.c.l.b16 %v193
        %v333 = vunpack.c.l.b16 %v194
        %v334 = vunpack.c.l.b16 %v195
        %v335 = vunpack.c.l.b16 %v196
        %v336 = vunpack.c.l.b16 %v197
        %v337 = vunpack.c.l.b16 %v198
        %v338 = vunpack.c.l.b16 %v199
        %v339 = vunpack.c.l.b16 %v200
        %v340 = vunpack.c.l.b16 %v201
        %v341 = vunpack.c.l.b16 %v202
        %v342 = vunpack.c.l.b16 %v203
        %v343 = vunpack.c.l.b16 %v204
        %v344 = vunpack.c.l.b16 %v205
        %v345 = vunpack.c.l.b16 %v206
        %v346 = vunpack.c.l.b16 %v207
        %v347 = vunpack.c.l.b16 %v208
        %v348 = vunpack.c.l.b16 %v209
        %v349 = vunpack.c.l.b16 %v210
        %v350 = vunpack.c.l.b16 %v211
        %v351 = vunpack.c.l.b16 %v212
        %v352 = vunpack.c.l.b16 %v213
        %v353 = vunpack.c.l.b16 %v214
        %v354 = vunpack.c.l.b16 %v215
        %v355 = vunpack.c.l.b16 %v216
        %v356 = vunpack.c.l.b16 %v217
        %v357 = vunpack.c.l.b16 %v218
        %v358 = vunpack.c.l.b16 %v219
        %v359 = vunpack.c.l.b16 %v220
        %v360 = vunpack.c.l.b16 %v221
        %v361 = vunpack.c.l.b16 %v222
        %v362 = vunpack.c.l.b16 %v223
        %v363 = vunpack.c.l.b16 %v224
        %v364 = vunpack.c.l.b16 %v225
        %v365 = vunpack.c.l.b16 %v226
        %v366 = vunpack.c.l.b16 %v227
        %v367 = vunpack.c.l.b16 %v228
        %v368 = vunpack.c.l.b16 %v229
        %v369 = vunpack.c.l.b16 %v230
        %v370 = vunpack.c.l.b16 %v231
        %v371 = vunpack.c.l.b16 %v232
        %v372 = vunpack.c.l.b16 %v233
        %v373 = vunpack.c.l.b16 %v234
        %v374 = vunpack.c.l.b16 %v235
        %v375 = vunpack.c.l.b16 %v236
        %v376 = vpack.c.b16 %v313, %v312
        %v377 = vpack.c.b16 %v315, %v314
        %v378 = vpack.c.b16 %v317, %v316
        %v379 = vpack.c.b16 %v319, %v318
        %v380 = vpack.c.b16 %v321, %v320
        %v381 = vpack.c.b16 %v323, %v322
        %v382 = vpack.c.b16 %v325, %v324
        %v383 = vpack.c.b16 %v327, %v326
        %v384 = vpack.c.b16 %v329, %v328
        %v385 = vpack.c.b16 %v331, %v330
        %v386 = vpack.c.b16 %v333, %v332
        %v387 = vpack.c.b16 %v335, %v334
        %v388 = vpack.c.b16 %v337, %v336
        %v389 = vpack.c.b16 %v339, %v338
        %v390 = vpack.c.b16 %v341, %v340
        %v391 = vpack.c.b16 %v343, %v342
        %v392 = vpack.c.b16 %v345, %v344
        %v393 = vpack.c.b16 %v347, %v346
        %v394 = vpack.c.b16 %v349, %v348
        %v395 = vpack.c.b16 %v351, %v350
        %v396 = vpack.c.b16 %v353, %v352
        %v397 = vpack.c.b16 %v355, %v354
        %v398 = vpack.c.b16 %v357, %v356
        %v399 = vpack.c.b16 %v359, %v358
        %v400 = vpack.c.b16 %v361, %v360
        %v401 = vpack.c.b16 %v363, %v362
        %v402 = vpack.c.b16 %v365, %v364
        %v403 = vpack.c.b16 %v367, %v366
        %v404 = vpack.c.b16 %v369, %v368
        %v405 = vpack.c.b16 %v371, %v370
        %v406 = vpack.c.b16 %v373, %v372
        %v407 = vpack.c.b16 %v375, %v374
        %v412 = vunpack.c.l.b16 %v237
        %v413 = vunpack.c.l.b16 %v238
        %v414 = vunpack.c.l.b16 %v239
        %v415 = vunpack.c.l.b16 %v240
        %v416 = vpack.c.b16 %v413, %v412
        %v417 = vpack.c.b16 %v415, %v414
        %vm419 = vcmask 220160
        %v421 = vsel %vm419, %v376, 0
        %v424 = vsel %vm419, %v377, 0
        %v427 = vsel %vm419, %v378, 0
        %v430 = vsel %vm419, %v379, 0
        %v433 = vsel %vm419, %v380, 0
        %v436 = vsel %vm419, %v381, 0
        %v439 = vsel %vm419, %v382, 0
        %v442 = vsel %vm419, %v383, 0
        %v445 = vsel %vm419, %v384, 0
        %v448 = vsel %vm419, %v385, 0
        %v451 = vsel %vm419, %v386, 0
        %v454 = vsel %vm419, %v387, 0
        %v457 = vsel %vm419, %v388, 0
        %v460 = vsel %vm419, %v389, 0
        %v463 = vsel %vm419, %v390, 0
        %v466 = vsel %vm419, %v391, 0
        %v469 = vsel %vm419, %v392, 0
        %v472 = vsel %vm419, %v393, 0
        %v475 = vsel %vm419, %v394, 0
        %v478 = vsel %vm419, %v395, 0
        %v481 = vsel %vm419, %v396, 0
        %v484 = vsel %vm419, %v397, 0
        %v487 = vsel %vm419, %v398, 0
        %v490 = vsel %vm419, %v399, 0
        %v493 = vsel %vm419, %v400, 0
        %v496 = vsel %vm419, %v401, 0
        %v499 = vsel %vm419, %v402, 0
        %v502 = vsel %vm419, %v403, 0
        %v505 = vsel %vm419, %v404, 0
        %v508 = vsel %vm419, %v405, 0
        %v511 = vsel %vm419, %v406, 0
        %v514 = vsel %vm419, %v407, 0
        %vm516 = vcmask 1044480
        %vm517 = vcmask 1045504
        %v518 = vsel %vm516, 4294967295, 65535
        %v519 = vsel %vm517, %v518, 0
        %v521 = vand.u32 %v417, %v519
        %523 = vmatprep.subr.bf16.mxu0 0
        %524 = vmatpush1.bf16.msra.mxu0 0
        %525 = vmatprep.subr.bf16.mxu0 0
        %526 = vmatpush1.bf16.msra.mxu0 0
        %527 = vmatprep.subr.bf16.mxu0 0
        %528 = vmatpush1.bf16.msra.mxu0 0
        %529 = vmatprep.subr.bf16.mxu0 0
        %530 = vmatpush1.bf16.msra.mxu0 0
        %531 = vmatprep.subr.bf16.mxu0 0
        %532 = vmatpush1.bf16.msra.mxu0 0
        %533 = vmatprep.subr.bf16.mxu0 0
        %534 = vmatpush1.bf16.msra.mxu0 0
        %535 = vmatprep.subr.bf16.mxu0 0
        %536 = vmatpush1.bf16.msra.mxu0 %v521
        %537 = vmatprep.subr.bf16.mxu0 0
        %538 = vmatpush1.bf16.msra.mxu0 %v416
        %539 = vmatprep.subr.bf16.mxu0 0
        %540 = vmatpush2.bf16.msra.mxu0 0
        %541 = vmatprep.subr.bf16.mxu0 0
        %542 = vmatpush2.bf16.msra.mxu0 0
        %543 = vmatprep.subr.bf16.mxu0 0
        %544 = vmatpush2.bf16.msra.mxu0 0
        %545 = vmatprep.subr.bf16.mxu0 0
        %546 = vmatpush2.bf16.msra.mxu0 0
        %547 = vmatprep.subr.bf16.mxu0 0
        %548 = vmatpush2.bf16.msra.mxu0 0
        %549 = vmatprep.subr.bf16.mxu0 0
        %550 = vmatpush2.bf16.msra.mxu0 0
        %551 = vmatprep.subr.bf16.mxu0 0
        %552 = vmatpush2.bf16.msra.mxu0 0
        %553 = vmatprep.subr.bf16.mxu0 0
        %554 = vmatpush2.bf16.msra.mxu0 0
        %555 = vmatprep.mubr.bf16.mxu0 0
        %556 = vmatmul.mubr.bf16.gmra.mxu0 %v421
        %v557 = vpop.f32.mrf.mxu0
        %v558 = vadd.f32 %v246, %v557
        %v559 = vpop.f32.mrf.mxu0
        %v560 = vpop.f32.mrf.mxu0
        %v561 = vadd.f32 %v246, %v560
        %v562 = vpop.f32.mrf.mxu0
        %563 = vmatprep.mubr.bf16.mxu0 0
        %564 = vmatmul.mubr.bf16.gmra.mxu0 %v424
        %v565 = vpop.f32.mrf.mxu0
        %v566 = vadd.f32 %v246, %v565
        %v567 = vpop.f32.mrf.mxu0
        %v568 = vpop.f32.mrf.mxu0
        %v569 = vadd.f32 %v246, %v568
        %v570 = vpop.f32.mrf.mxu0
        %571 = vmatprep.mubr.bf16.mxu0 0
        %572 = vmatmul.mubr.bf16.gmra.mxu0 %v427
        %v573 = vpop.f32.mrf.mxu0
        %v574 = vadd.f32 %v246, %v573
        %v575 = vpop.f32.mrf.mxu0
        %v576 = vpop.f32.mrf.mxu0
        %v577 = vadd.f32 %v246, %v576
        %v578 = vpop.f32.mrf.mxu0
        %579 = vmatprep.mubr.bf16.mxu0 0
        %580 = vmatmul.mubr.bf16.gmra.mxu0 %v430
        %v581 = vpop.f32.mrf.mxu0
        %v582 = vadd.f32 %v246, %v581
        %v583 = vpop.f32.mrf.mxu0
        %v584 = vpop.f32.mrf.mxu0
        %v585 = vadd.f32 %v246, %v584
        %v586 = vpop.f32.mrf.mxu0
        %587 = vmatprep.mubr.bf16.mxu0 0
        %588 = vmatmul.mubr.bf16.gmra.mxu0 %v433
        %v589 = vpop.f32.mrf.mxu0
        %v590 = vadd.f32 %v246, %v589
        %v591 = vpop.f32.mrf.mxu0
        %v592 = vpop.f32.mrf.mxu0
        %v593 = vadd.f32 %v246, %v592
        %v594 = vpop.f32.mrf.mxu0
        %595 = vmatprep.mubr.bf16.mxu0 0
        %596 = vmatmul.mubr.bf16.gmra.mxu0 %v436
        %v597 = vpop.f32.mrf.mxu0
        %v598 = vadd.f32 %v246, %v597
        %v599 = vpop.f32.mrf.mxu0
        %v600 = vpop.f32.mrf.mxu0
        %v601 = vadd.f32 %v246, %v600
        %v602 = vpop.f32.mrf.mxu0
        %603 = vmatprep.mubr.bf16.mxu0 0
        %604 = vmatmul.mubr.bf16.gmra.mxu0 %v439
        %v605 = vpop.f32.mrf.mxu0
        %v606 = vadd.f32 %v246, %v605
        %v607 = vpop.f32.mrf.mxu0
        %v608 = vpop.f32.mrf.mxu0
        %v609 = vadd.f32 %v246, %v608
        %v610 = vpop.f32.mrf.mxu0
        %611 = vmatprep.mubr.bf16.mxu0 0
        %612 = vmatmul.mubr.bf16.gmra.mxu0 %v442
        %v613 = vpop.f32.mrf.mxu0
        %v614 = vadd.f32 %v246, %v613
        %v615 = vpop.f32.mrf.mxu0
        %v616 = vpop.f32.mrf.mxu0
        %v617 = vadd.f32 %v246, %v616
        %v618 = vpop.f32.mrf.mxu0
        %619 = vmatprep.mubr.bf16.mxu0 0
        %620 = vmatmul.mubr.bf16.gmra.mxu0 %v445
        %v621 = vpop.f32.mrf.mxu0
        %v622 = vadd.f32 %v246, %v621
        %v623 = vpop.f32.mrf.mxu0
        %v624 = vpop.f32.mrf.mxu0
        %v625 = vadd.f32 %v246, %v624
        %v626 = vpop.f32.mrf.mxu0
        %627 = vmatprep.mubr.bf16.mxu0 0
        %628 = vmatmul.mubr.bf16.gmra.mxu0 %v448
        %v629 = vpop.f32.mrf.mxu0
        %v630 = vadd.f32 %v246, %v629
        %v631 = vpop.f32.mrf.mxu0
        %v632 = vpop.f32.mrf.mxu0
        %v633 = vadd.f32 %v246, %v632
        %v634 = vpop.f32.mrf.mxu0
        %635 = vmatprep.mubr.bf16.mxu0 0
        %636 = vmatmul.mubr.bf16.gmra.mxu0 %v451
        %v637 = vpop.f32.mrf.mxu0
        %v638 = vadd.f32 %v246, %v637
        %v639 = vpop.f32.mrf.mxu0
        %v640 = vpop.f32.mrf.mxu0
        %v641 = vadd.f32 %v246, %v640
        %v642 = vpop.f32.mrf.mxu0
        %643 = vmatprep.mubr.bf16.mxu0 0
        %644 = vmatmul.mubr.bf16.gmra.mxu0 %v454
        %v645 = vpop.f32.mrf.mxu0
        %v646 = vadd.f32 %v246, %v645
        %v647 = vpop.f32.mrf.mxu0
        %v648 = vpop.f32.mrf.mxu0
        %v649 = vadd.f32 %v246, %v648
        %v650 = vpop.f32.mrf.mxu0
        %651 = vmatprep.mubr.bf16.mxu0 0
        %652 = vmatmul.mubr.bf16.gmra.mxu0 %v457
        %v653 = vpop.f32.mrf.mxu0
        %v654 = vadd.f32 %v246, %v653
        %v655 = vpop.f32.mrf.mxu0
        %v656 = vpop.f32.mrf.mxu0
        %v657 = vadd.f32 %v246, %v656
        %v658 = vpop.f32.mrf.mxu0
        %659 = vmatprep.mubr.bf16.mxu0 0
        %660 = vmatmul.mubr.bf16.gmra.mxu0 %v460
        %v661 = vpop.f32.mrf.mxu0
        %v662 = vadd.f32 %v246, %v661
        %v663 = vpop.f32.mrf.mxu0
        %v664 = vpop.f32.mrf.mxu0
        %v665 = vadd.f32 %v246, %v664
        %v666 = vpop.f32.mrf.mxu0
        %667 = vmatprep.mubr.bf16.mxu0 0
        %668 = vmatmul.mubr.bf16.gmra.mxu0 %v463
        %v669 = vpop.f32.mrf.mxu0
        %v670 = vadd.f32 %v246, %v669
        %v671 = vpop.f32.mrf.mxu0
        %v672 = vpop.f32.mrf.mxu0
        %v673 = vadd.f32 %v246, %v672
        %v674 = vpop.f32.mrf.mxu0
        %675 = vmatprep.mubr.bf16.mxu0 0
        %676 = vmatmul.mubr.bf16.gmra.mxu0 %v466
        %v677 = vpop.f32.mrf.mxu0
        %v678 = vadd.f32 %v246, %v677
        %v679 = vpop.f32.mrf.mxu0
        %v680 = vpop.f32.mrf.mxu0
        %v681 = vadd.f32 %v246, %v680
        %v682 = vpop.f32.mrf.mxu0
        %683 = vmatprep.mubr.bf16.mxu0 0
        %684 = vmatmul.mubr.bf16.gmra.mxu0 %v469
        %v685 = vpop.f32.mrf.mxu0
        %v686 = vadd.f32 %v246, %v685
        %v687 = vpop.f32.mrf.mxu0
        %v688 = vpop.f32.mrf.mxu0
        %v689 = vadd.f32 %v246, %v688
        %v690 = vpop.f32.mrf.mxu0
        %691 = vmatprep.mubr.bf16.mxu0 0
        %692 = vmatmul.mubr.bf16.gmra.mxu0 %v472
        %v693 = vpop.f32.mrf.mxu0
        %v694 = vadd.f32 %v246, %v693
        %v695 = vpop.f32.mrf.mxu0
        %v696 = vpop.f32.mrf.mxu0
        %v697 = vadd.f32 %v246, %v696
        %v698 = vpop.f32.mrf.mxu0
        %699 = vmatprep.mubr.bf16.mxu0 0
        %700 = vmatmul.mubr.bf16.gmra.mxu0 %v475
        %v701 = vpop.f32.mrf.mxu0
        %v702 = vadd.f32 %v246, %v701
        %v703 = vpop.f32.mrf.mxu0
        %v704 = vpop.f32.mrf.mxu0
        %v705 = vadd.f32 %v246, %v704
        %v706 = vpop.f32.mrf.mxu0
        %707 = vmatprep.mubr.bf16.mxu0 0
        %708 = vmatmul.mubr.bf16.gmra.mxu0 %v478
        %v709 = vpop.f32.mrf.mxu0
        %v710 = vadd.f32 %v246, %v709
        %v711 = vpop.f32.mrf.mxu0
        %v712 = vpop.f32.mrf.mxu0
        %v713 = vadd.f32 %v246, %v712
        %v714 = vpop.f32.mrf.mxu0
        %715 = vmatprep.mubr.bf16.mxu0 0
        %716 = vmatmul.mubr.bf16.gmra.mxu0 %v481
        %v717 = vpop.f32.mrf.mxu0
        %v718 = vadd.f32 %v246, %v717
        %v719 = vpop.f32.mrf.mxu0
        %v720 = vpop.f32.mrf.mxu0
        %v721 = vadd.f32 %v246, %v720
        %v722 = vpop.f32.mrf.mxu0
        %723 = vmatprep.mubr.bf16.mxu0 0
        %724 = vmatmul.mubr.bf16.gmra.mxu0 %v484
        %v725 = vpop.f32.mrf.mxu0
        %v726 = vadd.f32 %v246, %v725
        %v727 = vpop.f32.mrf.mxu0
        %v728 = vpop.f32.mrf.mxu0
        %v729 = vadd.f32 %v246, %v728
        %v730 = vpop.f32.mrf.mxu0
        %731 = vmatprep.mubr.bf16.mxu0 0
        %732 = vmatmul.mubr.bf16.gmra.mxu0 %v487
        %v733 = vpop.f32.mrf.mxu0
        %v734 = vadd.f32 %v246, %v733
        %v735 = vpop.f32.mrf.mxu0
        %v736 = vpop.f32.mrf.mxu0
        %v737 = vadd.f32 %v246, %v736
        %v738 = vpop.f32.mrf.mxu0
        %739 = vmatprep.mubr.bf16.mxu0 0
        %740 = vmatmul.mubr.bf16.gmra.mxu0 %v490
        %v741 = vpop.f32.mrf.mxu0
        %v742 = vadd.f32 %v246, %v741
        %v743 = vpop.f32.mrf.mxu0
        %v744 = vpop.f32.mrf.mxu0
        %v745 = vadd.f32 %v246, %v744
        %v746 = vpop.f32.mrf.mxu0
        %747 = vmatprep.mubr.bf16.mxu0 0
        %748 = vmatmul.mubr.bf16.gmra.mxu0 %v493
        %v749 = vpop.f32.mrf.mxu0
        %v750 = vadd.f32 %v246, %v749
        %v751 = vpop.f32.mrf.mxu0
        %v752 = vpop.f32.mrf.mxu0
        %v753 = vadd.f32 %v246, %v752
        %v754 = vpop.f32.mrf.mxu0
        %755 = vmatprep.mubr.bf16.mxu0 0
        %756 = vmatmul.mubr.bf16.gmra.mxu0 %v496
        %v757 = vpop.f32.mrf.mxu0
        %v758 = vadd.f32 %v246, %v757
        %v759 = vpop.f32.mrf.mxu0
        %v760 = vpop.f32.mrf.mxu0
        %v761 = vadd.f32 %v246, %v760
        %v762 = vpop.f32.mrf.mxu0
        %763 = vmatprep.mubr.bf16.mxu0 0
        %764 = vmatmul.mubr.bf16.gmra.mxu0 %v499
        %v765 = vpop.f32.mrf.mxu0
        %v766 = vadd.f32 %v246, %v765
        %v767 = vpop.f32.mrf.mxu0
        %v768 = vpop.f32.mrf.mxu0
        %v769 = vadd.f32 %v246, %v768
        %v770 = vpop.f32.mrf.mxu0
        %771 = vmatprep.mubr.bf16.mxu0 0
        %772 = vmatmul.mubr.bf16.gmra.mxu0 %v502
        %v773 = vpop.f32.mrf.mxu0
        %v774 = vadd.f32 %v246, %v773
        %v775 = vpop.f32.mrf.mxu0
        %v776 = vpop.f32.mrf.mxu0
        %v777 = vadd.f32 %v246, %v776
        %v778 = vpop.f32.mrf.mxu0
        %779 = vmatprep.mubr.bf16.mxu0 0
        %780 = vmatmul.mubr.bf16.gmra.mxu0 %v505
        %v781 = vpop.f32.mrf.mxu0
        %v782 = vadd.f32 %v246, %v781
        %v783 = vpop.f32.mrf.mxu0
        %v784 = vpop.f32.mrf.mxu0
        %v785 = vadd.f32 %v246, %v784
        %v786 = vpop.f32.mrf.mxu0
        %787 = vmatprep.mubr.bf16.mxu0 0
        %788 = vmatmul.mubr.bf16.gmra.mxu0 %v508
        %v789 = vpop.f32.mrf.mxu0
        %v790 = vadd.f32 %v246, %v789
        %v791 = vpop.f32.mrf.mxu0
        %v792 = vpop.f32.mrf.mxu0
        %v793 = vadd.f32 %v246, %v792
        %v794 = vpop.f32.mrf.mxu0
        %795 = vmatprep.mubr.bf16.mxu0 0
        %796 = vmatmul.mubr.bf16.gmra.mxu0 %v511
        %v797 = vpop.f32.mrf.mxu0
        %v798 = vadd.f32 %v246, %v797
        %v799 = vpop.f32.mrf.mxu0
        %v800 = vpop.f32.mrf.mxu0
        %v801 = vadd.f32 %v246, %v800
        %v802 = vpop.f32.mrf.mxu0
        %803 = vmatprep.mubr.bf16.mxu0 0
        %804 = vmatmul.mubr.bf16.gmra.mxu0 %v514
        %v805 = vpop.f32.mrf.mxu0
        %v806 = vadd.f32 %v246, %v805
        %v807 = vpop.f32.mrf.mxu0
        %v808 = vpop.f32.mrf.mxu0
        %v809 = vadd.f32 %v246, %v808
        %v810 = vpop.f32.mrf.mxu0
        %811 = vdwg.mxu0
        %v812 = vmax.f32 %v558, 0.0
        %v813 = vmax.f32 %v561, 0.0
        %v814 = vmax.f32 %v566, 0.0
        %v815 = vmax.f32 %v569, 0.0
        %v816 = vmax.f32 %v574, 0.0
        %v817 = vmax.f32 %v577, 0.0
        %v818 = vmax.f32 %v582, 0.0
        %v819 = vmax.f32 %v585, 0.0
        %v820 = vmax.f32 %v590, 0.0
        %v821 = vmax.f32 %v593, 0.0
        %v822 = vmax.f32 %v598, 0.0
        %v823 = vmax.f32 %v601, 0.0
        %v824 = vmax.f32 %v606, 0.0
        %v825 = vmax.f32 %v609, 0.0
        %v826 = vmax.f32 %v614, 0.0
        %v827 = vmax.f32 %v617, 0.0
        %v828 = vmax.f32 %v622, 0.0
        %v829 = vmax.f32 %v625, 0.0
        %v830 = vmax.f32 %v630, 0.0
        %v831 = vmax.f32 %v633, 0.0
        %v832 = vmax.f32 %v638, 0.0
        %v833 = vmax.f32 %v641, 0.0
        %v834 = vmax.f32 %v646, 0.0
        %v835 = vmax.f32 %v649, 0.0
        %v836 = vmax.f32 %v654, 0.0
        %v837 = vmax.f32 %v657, 0.0
        %v838 = vmax.f32 %v662, 0.0
        %v839 = vmax.f32 %v665, 0.0
        %v840 = vmax.f32 %v670, 0.0
        %v841 = vmax.f32 %v673, 0.0
        %v842 = vmax.f32 %v678, 0.0
        %v843 = vmax.f32 %v681, 0.0
        %v844 = vmax.f32 %v686, 0.0
        %v845 = vmax.f32 %v689, 0.0
        %v846 = vmax.f32 %v694, 0.0
        %v847 = vmax.f32 %v697, 0.0
        %v848 = vmax.f32 %v702, 0.0
        %v849 = vmax.f32 %v705, 0.0
        %v850 = vmax.f32 %v710, 0.0
        %v851 = vmax.f32 %v713, 0.0
        %v852 = vmax.f32 %v718, 0.0
        %v853 = vmax.f32 %v721, 0.0
        %v854 = vmax.f32 %v726, 0.0
        %v855 = vmax.f32 %v729, 0.0
        %v856 = vmax.f32 %v734, 0.0
        %v857 = vmax.f32 %v737, 0.0
        %v858 = vmax.f32 %v742, 0.0
        %v859 = vmax.f32 %v745, 0.0
        %v860 = vmax.f32 %v750, 0.0
        %v861 = vmax.f32 %v753, 0.0
        %v862 = vmax.f32 %v758, 0.0
        %v863 = vmax.f32 %v761, 0.0
        %v864 = vmax.f32 %v766, 0.0
        %v865 = vmax.f32 %v769, 0.0
        %v866 = vmax.f32 %v774, 0.0
        %v867 = vmax.f32 %v777, 0.0
        %v868 = vmax.f32 %v782, 0.0
        %v869 = vmax.f32 %v785, 0.0
        %v870 = vmax.f32 %v790, 0.0
        %v871 = vmax.f32 %v793, 0.0
        %v872 = vmax.f32 %v798, 0.0
        %v873 = vmax.f32 %v801, 0.0
        %v874 = vmax.f32 %v806, 0.0
        %v875 = vmax.f32 %v809, 0.0
        %v876 = vpack.c.bf16 %v813, %v812
        %v877 = vpack.c.bf16 %v815, %v814
        %v878 = vpack.c.bf16 %v817, %v816
        %v879 = vpack.c.bf16 %v819, %v818
        %v880 = vpack.c.bf16 %v821, %v820
        %v881 = vpack.c.bf16 %v823, %v822
        %v882 = vpack.c.bf16 %v825, %v824
        %v883 = vpack.c.bf16 %v827, %v826
        %v884 = vpack.c.bf16 %v829, %v828
        %v885 = vpack.c.bf16 %v831, %v830
        %v886 = vpack.c.bf16 %v833, %v832
        %v887 = vpack.c.bf16 %v835, %v834
        %v888 = vpack.c.bf16 %v837, %v836
        %v889 = vpack.c.bf16 %v839, %v838
        %v890 = vpack.c.bf16 %v841, %v840
        %v891 = vpack.c.bf16 %v843, %v842
        %v892 = vpack.c.bf16 %v845, %v844
        %v893 = vpack.c.bf16 %v847, %v846
        %v894 = vpack.c.bf16 %v849, %v848
        %v895 = vpack.c.bf16 %v851, %v850
        %v896 = vpack.c.bf16 %v853, %v852
        %v897 = vpack.c.bf16 %v855, %v854
        %v898 = vpack.c.bf16 %v857, %v856
        %v899 = vpack.c.bf16 %v859, %v858
        %v900 = vpack.c.bf16 %v861, %v860
        %v901 = vpack.c.bf16 %v863, %v862
        %v902 = vpack.c.bf16 %v865, %v864
        %v903 = vpack.c.bf16 %v867, %v866
        %v904 = vpack.c.bf16 %v869, %v868
        %v905 = vpack.c.bf16 %v871, %v870
        %v906 = vpack.c.bf16 %v873, %v872
        %v907 = vpack.c.bf16 %v875, %v874
        %v940 = vunpack.c.l.b16 %v876
        %v941 = vunpack.c.h.b16 %v876
        %v942 = vunpack.c.l.b16 %v877
        %v943 = vunpack.c.h.b16 %v877
        %v944 = vunpack.c.l.b16 %v878
        %v945 = vunpack.c.h.b16 %v878
        %v946 = vunpack.c.l.b16 %v879
        %v947 = vunpack.c.h.b16 %v879
        %v948 = vunpack.c.l.b16 %v880
        %v949 = vunpack.c.h.b16 %v880
        %v950 = vunpack.c.l.b16 %v881
        %v951 = vunpack.c.h.b16 %v881
        %v952 = vunpack.c.l.b16 %v882
        %v953 = vunpack.c.h.b16 %v882
        %v954 = vunpack.c.l.b16 %v883
        %v955 = vunpack.c.h.b16 %v883
        %v956 = vunpack.c.l.b16 %v884
        %v957 = vunpack.c.h.b16 %v884
        %v958 = vunpack.c.l.b16 %v885
        %v959 = vunpack.c.h.b16 %v885
        %v960 = vunpack.c.l.b16 %v886
        %v961 = vunpack.c.h.b16 %v886
        %v962 = vunpack.c.l.b16 %v887
        %v963 = vunpack.c.h.b16 %v887
        %v964 = vunpack.c.l.b16 %v888
        %v965 = vunpack.c.h.b16 %v888
        %v966 = vunpack.c.l.b16 %v889
        %v967 = vunpack.c.h.b16 %v889
        %v968 = vunpack.c.l.b16 %v890
        %v969 = vunpack.c.h.b16 %v890
        %v970 = vunpack.c.l.b16 %v891
        %v971 = vunpack.c.h.b16 %v891
        %v972 = vunpack.c.l.b16 %v892
        %v973 = vunpack.c.h.b16 %v892
        %v974 = vunpack.c.l.b16 %v893
        %v975 = vunpack.c.h.b16 %v893
        %v976 = vunpack.c.l.b16 %v894
        %v977 = vunpack.c.h.b16 %v894
        %v978 = vunpack.c.l.b16 %v895
        %v979 = vunpack.c.h.b16 %v895
        %v980 = vunpack.c.l.b16 %v896
        %v981 = vunpack.c.h.b16 %v896
        %v982 = vunpack.c.l.b16 %v897
        %v983 = vunpack.c.h.b16 %v897
        %v984 = vunpack.c.l.b16 %v898
        %v985 = vunpack.c.h.b16 %v898
        %v986 = vunpack.c.l.b16 %v899
        %v987 = vunpack.c.h.b16 %v899
        %v988 = vunpack.c.l.b16 %v900
        %v989 = vunpack.c.h.b16 %v900
        %v990 = vunpack.c.l.b16 %v901
        %v991 = vunpack.c.h.b16 %v901
        %v992 = vunpack.c.l.b16 %v902
        %v993 = vunpack.c.h.b16 %v902
        %v994 = vunpack.c.l.b16 %v903
        %v995 = vunpack.c.h.b16 %v903
        %v996 = vunpack.c.l.b16 %v904
        %v997 = vunpack.c.h.b16 %v904
        %v998 = vunpack.c.l.b16 %v905
        %v999 = vunpack.c.h.b16 %v905
        %v1000 = vunpack.c.l.b16 %v906
        %v1001 = vunpack.c.h.b16 %v906
        %v1002 = vunpack.c.l.b16 %v907
        %v1003 = vunpack.c.h.b16 %v907
        %v1004 = vpack.c.b16 %v940, %v940
        %v1005 = vpack.c.b16 %v941, %v941
        %v1006 = vpack.c.b16 %v942, %v942
        %v1007 = vpack.c.b16 %v943, %v943
        %v1008 = vpack.c.b16 %v944, %v944
        %v1009 = vpack.c.b16 %v945, %v945
        %v1010 = vpack.c.b16 %v946, %v946
        %v1011 = vpack.c.b16 %v947, %v947
        %v1012 = vpack.c.b16 %v948, %v948
        %v1013 = vpack.c.b16 %v949, %v949
        %v1014 = vpack.c.b16 %v950, %v950
        %v1015 = vpack.c.b16 %v951, %v951
        %v1016 = vpack.c.b16 %v952, %v952
        %v1017 = vpack.c.b16 %v953, %v953
        %v1018 = vpack.c.b16 %v954, %v954
        %v1019 = vpack.c.b16 %v955, %v955
        %v1020 = vpack.c.b16 %v956, %v956
        %v1021 = vpack.c.b16 %v957, %v957
        %v1022 = vpack.c.b16 %v958, %v958
        %v1023 = vpack.c.b16 %v959, %v959
        %v1024 = vpack.c.b16 %v960, %v960
        %v1025 = vpack.c.b16 %v961, %v961
        %v1026 = vpack.c.b16 %v962, %v962
        %v1027 = vpack.c.b16 %v963, %v963
        %v1028 = vpack.c.b16 %v964, %v964
        %v1029 = vpack.c.b16 %v965, %v965
        %v1030 = vpack.c.b16 %v966, %v966
        %v1031 = vpack.c.b16 %v967, %v967
        %v1032 = vpack.c.b16 %v968, %v968
        %v1033 = vpack.c.b16 %v969, %v969
        %v1034 = vpack.c.b16 %v970, %v970
        %v1035 = vpack.c.b16 %v971, %v971
        %v1036 = vpack.c.b16 %v972, %v972
        %v1037 = vpack.c.b16 %v973, %v973
        %v1038 = vpack.c.b16 %v974, %v974
        %v1039 = vpack.c.b16 %v975, %v975
        %v1040 = vpack.c.b16 %v976, %v976
        %v1041 = vpack.c.b16 %v977, %v977
        %v1042 = vpack.c.b16 %v978, %v978
        %v1043 = vpack.c.b16 %v979, %v979
        %v1044 = vpack.c.b16 %v980, %v980
        %v1045 = vpack.c.b16 %v981, %v981
        %v1046 = vpack.c.b16 %v982, %v982
        %v1047 = vpack.c.b16 %v983, %v983
        %v1048 = vpack.c.b16 %v984, %v984
        %v1049 = vpack.c.b16 %v985, %v985
        %v1050 = vpack.c.b16 %v986, %v986
        %v1051 = vpack.c.b16 %v987, %v987
        %v1052 = vpack.c.b16 %v988, %v988
        %v1053 = vpack.c.b16 %v989, %v989
        %v1054 = vpack.c.b16 %v990, %v990
        %v1055 = vpack.c.b16 %v991, %v991
        %v1056 = vpack.c.b16 %v992, %v992
        %v1057 = vpack.c.b16 %v993, %v993
        %v1058 = vpack.c.b16 %v994, %v994
        %v1059 = vpack.c.b16 %v995, %v995
        %v1060 = vpack.c.b16 %v996, %v996
        %v1061 = vpack.c.b16 %v997, %v997
        %v1062 = vpack.c.b16 %v998, %v998
        %v1063 = vpack.c.b16 %v999, %v999
        %v1064 = vpack.c.b16 %v1000, %v1000
        %v1065 = vpack.c.b16 %v1001, %v1001
        %v1066 = vpack.c.b16 %v1002, %v1002
        %v1067 = vpack.c.b16 %v1003, %v1003
        %1132 = vst [vmem:[%s164] sm:$0xf] %v1004
        %1133 = vst [vmem:[%s164 + $0x4] sm:$0xf] %v1005
        %1134 = vst [vmem:[%s164 + $0x8] sm:$0xf] %v1006
        %1135 = vst [vmem:[%s164 + $0xc] sm:$0xf] %v1007
        %1136 = vst [vmem:[%s164 + $0x10] sm:$0xf] %v1008
        %1137 = vst [vmem:[%s164 + $0x14] sm:$0xf] %v1009
        %1138 = vst [vmem:[%s164 + $0x18] sm:$0xf] %v1010
        %1139 = vst [vmem:[%s164 + $0x1c] sm:$0xf] %v1011
        %1140 = vst [vmem:[%s164 + $0x20] sm:$0xf] %v1012
        %1141 = vst [vmem:[%s164 + $0x24] sm:$0xf] %v1013
        %1142 = vst [vmem:[%s164 + $0x28] sm:$0xf] %v1014
        %1143 = vst [vmem:[%s164 + $0x2c] sm:$0xf] %v1015
        %1144 = vst [vmem:[%s164 + $0x30] sm:$0xf] %v1016
        %1145 = vst [vmem:[%s164 + $0x34] sm:$0xf] %v1017
        %1146 = vst [vmem:[%s164 + $0x38] sm:$0xf] %v1018
        %1147 = vst [vmem:[%s164 + $0x3c] sm:$0xf] %v1019
        %1148 = vst [vmem:[%s164 + $0x40] sm:$0xf] %v1020
        %1149 = vst [vmem:[%s164 + $0x44] sm:$0xf] %v1021
        %1150 = vst [vmem:[%s164 + $0x48] sm:$0xf] %v1022
        %1151 = vst [vmem:[%s164 + $0x4c] sm:$0xf] %v1023
        %1152 = vst [vmem:[%s164 + $0x50] sm:$0xf] %v1024
        %1153 = vst [vmem:[%s164 + $0x54] sm:$0xf] %v1025
        %1154 = vst [vmem:[%s164 + $0x58] sm:$0xf] %v1026
        %1155 = vst [vmem:[%s164 + $0x5c] sm:$0xf] %v1027
        %1156 = vst [vmem:[%s164 + $0x60] sm:$0xf] %v1028
        %1157 = vst [vmem:[%s164 + $0x64] sm:$0xf] %v1029
        %1158 = vst [vmem:[%s164 + $0x68] sm:$0xf] %v1030
        %1159 = vst [vmem:[%s164 + $0x6c] sm:$0xf] %v1031
        %1160 = vst [vmem:[%s164 + $0x70] sm:$0xf] %v1032
        %1161 = vst [vmem:[%s164 + $0x74] sm:$0xf] %v1033
        %1162 = vst [vmem:[%s164 + $0x78] sm:$0xf] %v1034
        %1163 = vst [vmem:[%s164 + $0x7c] sm:$0xf] %v1035
        %1164 = vst [vmem:[%s164 + $0x80] sm:$0xf] %v1036
        %1165 = vst [vmem:[%s164 + $0x84] sm:$0xf] %v1037
        %1166 = vst [vmem:[%s164 + $0x88] sm:$0xf] %v1038
        %1167 = vst [vmem:[%s164 + $0x8c] sm:$0xf] %v1039
        %1168 = vst [vmem:[%s164 + $0x90] sm:$0xf] %v1040
        %1169 = vst [vmem:[%s164 + $0x94] sm:$0xf] %v1041
        %1170 = vst [vmem:[%s164 + $0x98] sm:$0xf] %v1042
        %1171 = vst [vmem:[%s164 + $0x9c] sm:$0xf] %v1043
        %1172 = vst [vmem:[%s164 + $0xa0] sm:$0xf] %v1044
        %1173 = vst [vmem:[%s164 + $0xa4] sm:$0xf] %v1045
        %1174 = vst [vmem:[%s164 + $0xa8] sm:$0xf] %v1046
        %1175 = vst [vmem:[%s164 + $0xac] sm:$0xf] %v1047
        %1176 = vst [vmem:[%s164 + $0xb0] sm:$0xf] %v1048
        %1177 = vst [vmem:[%s164 + $0xb4] sm:$0xf] %v1049
        %1178 = vst [vmem:[%s164 + $0xb8] sm:$0xf] %v1050
        %1179 = vst [vmem:[%s164 + $0xbc] sm:$0xf] %v1051
        %1180 = vst [vmem:[%s164 + $0xc0] sm:$0xf] %v1052
        %1181 = vst [vmem:[%s164 + $0xc4] sm:$0xf] %v1053
        %1182 = vst [vmem:[%s164 + $0xc8] sm:$0xf] %v1054
        %1183 = vst [vmem:[%s164 + $0xcc] sm:$0xf] %v1055
        %1184 = vst [vmem:[%s164 + $0xd0] sm:$0xf] %v1056
        %1185 = vst [vmem:[%s164 + $0xd4] sm:$0xf] %v1057
        %1186 = vst [vmem:[%s164 + $0xd8] sm:$0xf] %v1058
        %1187 = vst [vmem:[%s164 + $0xdc] sm:$0xf] %v1059
        %1188 = vst [vmem:[%s164 + $0xe0] sm:$0xf] %v1060
        %1189 = vst [vmem:[%s164 + $0xe4] sm:$0xf] %v1061
        %1190 = vst [vmem:[%s164 + $0xe8] sm:$0xf] %v1062
        %1191 = vst [vmem:[%s164 + $0xec] sm:$0xf] %v1063
        %1192 = vst [vmem:[%s164 + $0xf0] sm:$0xf] %v1064
        %1193 = vst [vmem:[%s164 + $0xf4] sm:$0xf] %v1065
        %1194 = vst [vmem:[%s164 + $0xf8] sm:$0xf] %v1066
        %1195 = vst [vmem:[%s164 + $0xfc] sm:$0xf] %v1067
        %s1196 = sand.u32 %s93, 1
        %s1197 = scalar_lea.sflag [#allocation3], %s1196
        %s1198 = sand.u32 %s93, 1
        %s1199 = smul.addr %s1198, 256
        %s1200 = scalar_lea.vmem [#allocation2], %s1199
        // Predicated region
        $region33: #{tpu_custom_call.1} parent=31 // pred_check
          %p1201 = pneg %p103
        $region34: #{tpu_custom_call.1} parent=31 // pred_check_branch
          %1203 = sbr.rel (%p1201) target = $region36
        $region35: #{tpu_custom_call.1} parent=31 // pred_region
          %s1204 = smul.u32 64, %s17
          %s1206 = ssub.s32 4096, 4096
          %1207 = vsyncadd %s1197, %s1206
          %s1208 = smul.addr %s1204, 64
          %s1209 = scalar_lea.hbm %s3, %s1208
          %s1210 = sshll.u32 %s1200, 4
          %s1211 = int_to_ptr.vmem [resolvable:$true] %s1210
          %1216 = dma.vmem_to_hbm [thread:$0]  %s1211, 4096, %s1209, %s1197, 64, 64, 4
        $region36: #{tpu_custom_call.1} parent=31 // pred_fallthru
          _
      $region32: #{tpu_custom_call.1} parent=5 // pred_fallthru
        _
      %p1217 = scmp.le.s32.totalorder 2, %s12
      // Predicated region
      $region37: #{tpu_custom_call.1} parent=5 // pred_check
        %p1218 = pneg %p1217
      $region38: #{tpu_custom_call.1} parent=5 // pred_check_branch
        %1220 = sbr.rel (%p1218) target = $region40
      $region39: #{tpu_custom_call.1} parent=5 // pred_region
        %s1221 = ssub.s32 %s12, 2
        // Predicated region
        $region41: #{tpu_custom_call.1} parent=39 // pred_check
          %p1222 = pneg %p109
        $region42: #{tpu_custom_call.1} parent=39 // pred_check_branch
          %1224 = sbr.rel (%p1222) target = $region44
        $region43: #{tpu_custom_call.1} parent=39 // pred_region
          %s1225 = sand.u32 %s94, 1
          %s1226 = scalar_lea.sflag [#allocation3], %s1225
          %s1227 = sand.u32 %s94, 1
          %s1228 = smul.addr %s1227, 256
          %s1229 = scalar_lea.vmem [#allocation2], %s1228
          %1230 = dma.done %s1226, 4096
        $region44: #{tpu_custom_call.1} parent=39 // pred_fallthru
          _
      $region40: #{tpu_custom_call.1} parent=5 // pred_fallthru
        _
    $region6: #{tpu_custom_call.1} parent=1 // loop_footer
      %s16 = sadd.s32 1, %s12
    $region7: #{tpu_custom_call.1} parent=1 // loop_footer_branch
      %11 = sbr.rel target = $region3
    $region8: #{tpu_custom_call.1} parent=1 // loop_exit
      _
    %1231 = vsyncpa [#allocation3], 1
    %s1232 = scalar_lea.sflag [#allocation3], 1
    %1233 = vsyncpa %s1232, 1

</llo_original>
